<compile_context>
chip_gen: v7x
topology: tpu7x:2x2x1
jax: 0.10.0
libtpu: 0.0.40
codegen_flags: <defaults>
</compile_context>

<pallas_src>
import functools

import jax
import jax.numpy as jnp
from jax.experimental import pallas as pl
from jax.experimental.pallas import tpu as pltpu

IN_EPS = 1e-5      # nn.InstanceNorm2d default eps
GEM_EPS = 1e-6     # gem() eps
GEM_P = 3.0        # gem() p


def _special_att_kernel(x_ref, w1_ref, w2_ref, xsp_ref, xin_ref, *,
                        tile_n, hw_true, hw_padded):
    inv_hw = 1.0 / float(hw_true)

    x = x_ref[...].astype(jnp.float32)                       # (TN, C, HWp)

    # ---- InstanceNorm2d statistics, single pass over the block ----
    # Padded lanes (if any) are zero, so plain sums divided by the true HW are exact.
    s1 = jnp.sum(x, axis=-1, keepdims=True)                  # (TN, C, 1)
    s2 = jnp.sum(x * x, axis=-1, keepdims=True)              # (TN, C, 1)
    mean = s1 * inv_hw
    var = jnp.maximum(s2 * inv_hw - mean * mean, 0.0)        # clamp: cancellation safety
    x_in = (x - mean) * jax.lax.rsqrt(var + IN_EPS)          # (TN, C, HWp)
    # Write x_IN immediately; it is re-read from the output buffer later so the
    # compiler does not have to keep it live across the GeM reduction / matmuls.
    xin_ref[...] = x_in.astype(xin_ref.dtype)

    # ---- GeM pooling over x_R = x - x_IN ----
    x_r = x - x_in
    clamped = jnp.maximum(x_r, GEM_EPS)
    cube = clamped * clamped * clamped
    if hw_padded != hw_true:
        # Padded lanes would contribute (mean/std)^3 etc.; mask them out of the sum.
        lane = jax.lax.broadcasted_iota(jnp.int32, cube.shape, dimension=2)
        cube = jnp.where(lane < hw_true, cube, 0.0)
    pooled = (jnp.sum(cube, axis=-1, keepdims=True) * inv_hw) ** (1.0 / GEM_P)  # (TN, C, 1)

    w1 = w1_ref[...].astype(jnp.float32)                     # (Cr, C)
    w2 = w2_ref[...].astype(jnp.float32)                     # (C, Cr)

    # ---- per-sample channel attention (tiny column matmuls) + recombine ----
    # tile_n is a small compile-time constant, so this unrolls.  x and x_IN are
    # re-read per sample from their VMEM buffers (no big live temporaries here).
    for n in range(tile_n):
        h = jnp.dot(w1, pooled[n], preferred_element_type=jnp.float32)   # (Cr, 1)
        h = jnp.maximum(h, 0.0)                                          # ReLU
        m = jnp.dot(w2, h, preferred_element_type=jnp.float32)           # (C, 1)
        mask = jax.nn.sigmoid(m)                                         # (C, 1)
        x_n = x_ref[n].astype(jnp.float32)                               # (C, HWp)
        xin_n = xin_ref[n].astype(jnp.float32)                           # (C, HWp)
        xsp_ref[n] = ((x_n - xin_n) * mask + xin_n).astype(xsp_ref.dtype)


def _choose_tile_n(N, C, HWp, dtype_bytes,
                   target_block_bytes=3 * 1024 * 1024, max_tile_n=16):
    """Samples per grid step: block of a few MiB, >=2 grid steps, bounded unroll."""
    per_sample = C * HWp * dtype_bytes
    tn = max(1, target_block_bytes // per_sample)
    tn = min(tn, max_tile_n, N)
    if N >= 2:
        tn = min(tn, -(-N // 2))   # keep at least 2 grid steps (v7x has 2 TCs)
    return max(1, int(tn))


def special_att_forward(x, w1, w2, *, target_block_bytes=3 * 1024 * 1024):
    """x: (N, C, H, W); w1: (C//r, C); w2: (C, C//r). Returns (x_sp, x_IN) in NCHW."""
    N, C, H, W = x.shape
    HW = H * W
    HWp = ((HW + 127) // 128) * 128          # lane-dense last dim (unmasked stores)
    Cr = w1.shape[0]
    dtype_bytes = jnp.dtype(x.dtype).itemsize

    tn = _choose_tile_n(N, C, HWp, dtype_bytes, target_block_bytes)
    Np = pl.cdiv(N, tn) * tn

    x2 = x.reshape(N, C, HW)
    if HWp != HW or Np != N:
        # Zero padding is neutral: padded samples produce finite garbage that is
        # sliced away; padded lanes are masked inside the kernel reductions.
        x2 = jnp.pad(x2, ((0, Np - N), (0, 0), (0, HWp - HW)))

    kernel = functools.partial(_special_att_kernel,
                               tile_n=tn, hw_true=HW, hw_padded=HWp)

    xsp, xin = pl.pallas_call(
        kernel,
        out_shape=(jax.ShapeDtypeStruct((Np, C, HWp), x.dtype),
                   jax.ShapeDtypeStruct((Np, C, HWp), x.dtype)),
        grid_spec=pltpu.PrefetchScalarGridSpec(
            num_scalar_prefetch=0,
            grid=(Np // tn,),
            in_specs=[pl.BlockSpec((tn, C, HWp), lambda n: (n, 0, 0)),
                      pl.BlockSpec((Cr, C), lambda n: (0, 0)),
                      pl.BlockSpec((C, Cr), lambda n: (0, 0))],
            out_specs=[pl.BlockSpec((tn, C, HWp), lambda n: (n, 0, 0)),
                       pl.BlockSpec((tn, C, HWp), lambda n: (n, 0, 0))],
        ),
        compiler_params=pltpu.CompilerParams(
            dimension_semantics=("parallel",),
            # ~8x the per-step block footprint stays well under this on all of
            # v5e (128 MiB phys), v6e (128 MiB), v7x (64 MiB).
            vmem_limit_bytes=32 * 1024 * 1024,
        ),
    )(x2, w1, w2)

    if HWp != HW or Np != N:
        xsp = xsp[:N, :, :HW]
        xin = xin[:N, :, :HW]
    return xsp.reshape(N, C, H, W), xin.reshape(N, C, H, W)


def special_att_reference(x, w1, w2):
    """Pure-JAX reference mirroring the PyTorch forward."""
    mean = x.mean(axis=(2, 3), keepdims=True)
    var = ((x - mean) ** 2).mean(axis=(2, 3), keepdims=True)
    x_in = (x - mean) / jnp.sqrt(var + IN_EPS)
    x_r = x - x_in
    clamped = jnp.maximum(x_r, GEM_EPS)
    pooled = (clamped ** 3).mean(axis=(2, 3)) ** (1.0 / GEM_P)        # (N, C)
    h = jnp.maximum(pooled @ w1.T, 0.0)                               # (N, Cr)
    mask = jax.nn.sigmoid(h @ w2.T)                                   # (N, C)
    x_sp = x_r * mask[:, :, None, None] + x_in
    return x_sp, x_in


if __name__ == "__main__":
    key = jax.random.PRNGKey(0)
    kx, k1, k2, kx2 = jax.random.split(key, 4)

    # Deterministic 1x1-conv weights (Conv2d(dim, dim//r) and Conv2d(dim//r, dim), no bias)
    N, C, H, W = 2, 32, 16, 16
    r = 16
    Cr = C // r
    x = jax.random.normal(kx, (N, C, H, W), dtype=jnp.float32)
    w1 = jax.random.normal(k1, (Cr, C), dtype=jnp.float32) * (2.0 / C) ** 0.5
    w2 = jax.random.normal(k2, (C, Cr), dtype=jnp.float32) * (2.0 / Cr) ** 0.5

    # Case 1: 128-aligned spatial size (HW = 256), N = 2 -> 2 grid steps.
    x_sp, x_in = special_att_forward(x, w1, w2)
    jax.block_until_ready((x_sp, x_in))
    ref_sp, ref_in = special_att_reference(x, w1, w2)
    assert jnp.allclose(x_sp, ref_sp, rtol=1e-4, atol=1e-5), "x_sp mismatch (aligned)"
    assert jnp.allclose(x_in, ref_in, rtol=1e-4, atol=1e-5), "x_IN mismatch (aligned)"

    # Case 2: non-128-multiple spatial size (6x6 -> HW=36) and odd batch,
    # exercising the lane-padding + batch-padding path.
    N2, H2, W2 = 3, 6, 6
    xb = jax.random.normal(kx2, (N2, C, H2, W2), dtype=jnp.float32)
    xb_sp, xb_in = special_att_forward(xb, w1, w2)
    jax.block_until_ready((xb_sp, xb_in))
    refb_sp, refb_in = special_att_reference(xb, w1, w2)
    assert jnp.allclose(xb_sp, refb_sp, rtol=1e-4, atol=1e-5), "x_sp mismatch (padded)"
    assert jnp.allclose(xb_in, refb_in, rtol=1e-4, atol=1e-5), "x_IN mismatch (padded)"

    print("KERNEL_OK")
</pallas_src>

<mosaic_0001>
module attributes {stable_mosaic.version = 11 : i64} {
  func.func @_special_att_kernel(%arg0: i32, %arg1: memref<1x32x256xf32, #tpu.memory_space<vmem>>, %arg2: memref<2x32xf32, #tpu.memory_space<vmem>>, %arg3: memref<32x2xf32, #tpu.memory_space<vmem>>, %arg4: memref<1x32x256xf32, #tpu.memory_space<vmem>>, %arg5: memref<1x32x256xf32, #tpu.memory_space<vmem>>) attributes {dimension_semantics = [#tpu.dimension_semantics<parallel>], iteration_bounds = array<i64: 2>, scalar_prefetch = 0 : i64, scratch_operands = 0 : i64, tpu.core_type = #tpu.core_type<tc>, window_params = [{transform_indices = @transform_0, window_bounds = array<i64: 1, 32, 256>}, {pipeline_mode = #tpu.pipeline_mode<synchronous>, transform_indices = @transform_1, window_bounds = array<i64: 2, 32>}, {pipeline_mode = #tpu.pipeline_mode<synchronous>, transform_indices = @transform_2, window_bounds = array<i64: 32, 2>}, {transform_indices = @transform_3, window_bounds = array<i64: 1, 32, 256>}, {transform_indices = @transform_4, window_bounds = array<i64: 1, 32, 256>}]} {
    %c0 = arith.constant 0 : index
    %c0_0 = arith.constant 0 : index
    %c0_1 = arith.constant 0 : index
    %0 = vector.load %arg1[%c0, %c0_0, %c0_1] : memref<1x32x256xf32, #tpu.memory_space<vmem>>, vector<1x32x256xf32>
    %cst = arith.constant dense<0.000000e+00> : vector<1x32xf32>
    %1 = vector.multi_reduction <add>, %0, %cst [2] : vector<1x32x256xf32> to vector<1x32xf32>
    %2 = vector.shape_cast %1 : vector<1x32xf32> to vector<1x32x1xf32>
    %3 = arith.mulf %0, %0 : vector<1x32x256xf32>
    %cst_2 = arith.constant dense<0.000000e+00> : vector<1x32xf32>
    %4 = vector.multi_reduction <add>, %3, %cst_2 [2] : vector<1x32x256xf32> to vector<1x32xf32>
    %5 = vector.shape_cast %4 : vector<1x32xf32> to vector<1x32x1xf32>
    %cst_3 = arith.constant 3.906250e-03 : f32
    %6 = vector.broadcast %cst_3 : f32 to vector<1x32x1xf32>
    %7 = arith.mulf %2, %6 : vector<1x32x1xf32>
    %cst_4 = arith.constant 3.906250e-03 : f32
    %8 = vector.broadcast %cst_4 : f32 to vector<1x32x1xf32>
    %9 = arith.mulf %5, %8 : vector<1x32x1xf32>
    %10 = arith.mulf %7, %7 : vector<1x32x1xf32>
    %11 = arith.subf %9, %10 : vector<1x32x1xf32>
    %cst_5 = arith.constant 0.000000e+00 : f32
    %12 = vector.broadcast %cst_5 : f32 to vector<1x32x1xf32>
    %13 = arith.maximumf %11, %12 : vector<1x32x1xf32>
    %14 = vector.broadcast %7 : vector<1x32x1xf32> to vector<1x32x256xf32>
    %15 = arith.subf %0, %14 : vector<1x32x256xf32>
    %cst_6 = arith.constant 9.99999974E-6 : f32
    %16 = vector.broadcast %cst_6 : f32 to vector<1x32x1xf32>
    %17 = arith.addf %13, %16 : vector<1x32x1xf32>
    %18 = math.rsqrt %17 : vector<1x32x1xf32>
    %19 = vector.broadcast %18 : vector<1x32x1xf32> to vector<1x32x256xf32>
    %20 = arith.mulf %15, %19 : vector<1x32x256xf32>
    %c0_7 = arith.constant 0 : index
    %c0_8 = arith.constant 0 : index
    %c0_9 = arith.constant 0 : index
    %21 = vector.load %arg5[%c0_7, %c0_8, %c0_9] : memref<1x32x256xf32, #tpu.memory_space<vmem>>, vector<1x32x256xf32>
    tpu.vector_store %arg5[%c0_7, %c0_8, %c0_9], %20 {strides = array<i32>} : memref<1x32x256xf32, #tpu.memory_space<vmem>>, vector<1x32x256xf32>,
    %22 = arith.subf %0, %20 : vector<1x32x256xf32>
    %cst_10 = arith.constant 9.99999997E-7 : f32
    %23 = vector.broadcast %cst_10 : f32 to vector<1x32x256xf32>
    %24 = arith.maximumf %22, %23 : vector<1x32x256xf32>
    %25 = arith.mulf %24, %24 : vector<1x32x256xf32>
    %26 = arith.mulf %25, %24 : vector<1x32x256xf32>
    %cst_11 = arith.constant dense<0.000000e+00> : vector<1x32xf32>
    %27 = vector.multi_reduction <add>, %26, %cst_11 [2] : vector<1x32x256xf32> to vector<1x32xf32>
    %28 = vector.shape_cast %27 : vector<1x32xf32> to vector<1x32x1xf32>
    %cst_12 = arith.constant 3.906250e-03 : f32
    %29 = vector.broadcast %cst_12 : f32 to vector<1x32x1xf32>
    %30 = arith.mulf %28, %29 : vector<1x32x1xf32>
    %cst_13 = arith.constant 0.333333343 : f32
    %31 = vector.broadcast %cst_13 : f32 to vector<1x32x1xf32>
    %32 = math.powf %30, %31 : vector<1x32x1xf32>
    %c0_14 = arith.constant 0 : index
    %c0_15 = arith.constant 0 : index
    %33 = vector.load %arg2[%c0_14, %c0_15] : memref<2x32xf32, #tpu.memory_space<vmem>>, vector<2x32xf32>
    %c0_16 = arith.constant 0 : index
    %c0_17 = arith.constant 0 : index
    %34 = vector.load %arg3[%c0_16, %c0_17] : memref<32x2xf32, #tpu.memory_space<vmem>>, vector<32x2xf32>
    %35 = vector.shape_cast %32 : vector<1x32x1xf32> to vector<32x1xf32>
    %cst_18 = arith.constant dense<0.000000e+00> : vector<2x1xf32>
    %36 = tpu.matmul %33, %35, %cst_18 {dimension_numbers = #tpu.dot_dimension_numbers<[1], [0], [0], [1], [0, 0, 1, 1], [], []>} : vector<2x32xf32>, vector<32x1xf32>, vector<2x1xf32> -> vector<2x1xf32>
    %cst_19 = arith.constant 0.000000e+00 : f32
    %37 = vector.broadcast %cst_19 : f32 to vector<2x1xf32>
    %38 = arith.maximumf %36, %37 : vector<2x1xf32>
    %cst_20 = arith.constant dense<0.000000e+00> : vector<32x1xf32>
    %39 = tpu.matmul %34, %38, %cst_20 {dimension_numbers = #tpu.dot_dimension_numbers<[1], [0], [0], [1], [0, 0, 1, 1], [], []>} : vector<32x2xf32>, vector<2x1xf32>, vector<32x1xf32> -> vector<32x1xf32>
    %40 = arith.negf %39 : vector<32x1xf32>
    %41 = math.exp %40 : vector<32x1xf32>
    %cst_21 = arith.constant 1.000000e+00 : f32
    %42 = vector.broadcast %cst_21 : f32 to vector<32x1xf32>
    %43 = arith.addf %42, %41 : vector<32x1xf32>
    %44 = arith.divf %42, %43 : vector<32x1xf32>
    %c0_22 = arith.constant 0 : index
    %c0_23 = arith.constant 0 : index
    %c0_24 = arith.constant 0 : index
    %45 = vector.load %arg1[%c0_22, %c0_23, %c0_24] : memref<1x32x256xf32, #tpu.memory_space<vmem>>, vector<1x32x256xf32>
    %46 = vector.shape_cast %45 : vector<1x32x256xf32> to vector<32x256xf32>
    %c0_25 = arith.constant 0 : index
    %c0_26 = arith.constant 0 : index
    %c0_27 = arith.constant 0 : index
    %47 = vector.load %arg5[%c0_25, %c0_26, %c0_27] : memref<1x32x256xf32, #tpu.memory_space<vmem>>, vector<1x32x256xf32>
    %48 = vector.shape_cast %47 : vector<1x32x256xf32> to vector<32x256xf32>
    %49 = arith.subf %46, %48 : vector<32x256xf32>
    %50 = vector.broadcast %44 : vector<32x1xf32> to vector<32x256xf32>
    %51 = arith.mulf %49, %50 : vector<32x256xf32>
    %52 = arith.addf %51, %48 : vector<32x256xf32>
    %c0_28 = arith.constant 0 : index
    %c0_29 = arith.constant 0 : index
    %c0_30 = arith.constant 0 : index
    %53 = vector.load %arg4[%c0_28, %c0_29, %c0_30] : memref<1x32x256xf32, #tpu.memory_space<vmem>>, vector<1x32x256xf32>
    %54 = vector.shape_cast %53 : vector<1x32x256xf32> to vector<32x256xf32>
    %55 = vector.shape_cast %52 : vector<32x256xf32> to vector<1x32x256xf32>
    tpu.vector_store %arg4[%c0_28, %c0_29, %c0_30], %55 {strides = array<i32>} : memref<1x32x256xf32, #tpu.memory_space<vmem>>, vector<1x32x256xf32>,
    return
  }
  func.func @transform_0(%arg0: i32) -> (i32, i32, i32) {
    %c0_i32 = arith.constant 0 : i32
    %c0_i32_0 = arith.constant 0 : i32
    %c0_i32_1 = arith.constant 0 : i32
    return %arg0, %c0_i32, %c0_i32_0 : i32, i32, i32
  }
  func.func @transform_1(%arg0: i32) -> (i32, i32) {
    %c0_i32 = arith.constant 0 : i32
    %c0_i32_0 = arith.constant 0 : i32
    %c0_i32_1 = arith.constant 0 : i32
    return %c0_i32, %c0_i32_0 : i32, i32
  }
  func.func @transform_2(%arg0: i32) -> (i32, i32) {
    %c0_i32 = arith.constant 0 : i32
    %c0_i32_0 = arith.constant 0 : i32
    %c0_i32_1 = arith.constant 0 : i32
    return %c0_i32, %c0_i32_0 : i32, i32
  }
  func.func @transform_3(%arg0: i32) -> (i32, i32, i32) {
    %c0_i32 = arith.constant 0 : i32
    %c0_i32_0 = arith.constant 0 : i32
    %c0_i32_1 = arith.constant 0 : i32
    return %arg0, %c0_i32, %c0_i32_0 : i32, i32, i32
  }
  func.func @transform_4(%arg0: i32) -> (i32, i32, i32) {
    %c0_i32 = arith.constant 0 : i32
    %c0_i32_0 = arith.constant 0 : i32
    %c0_i32_1 = arith.constant 0 : i32
    return %arg0, %c0_i32, %c0_i32_0 : i32, i32, i32
  }
}

</mosaic_0001>

<llo_original>
// kernel: tpu_custom_call.1
$region0: #{tpu_custom_call.1}
  #allocation0 [shape = 'u32[]', space=smem, size = 0x4, offset = 0x4, fixed_abs, tag = 'smem constant byte address 0x4 - core index']
  #allocation1 [shape = 'u32[144,128]{1,0:T(1,128)}', space=vmem, size = 0x12000, scoped, tag = 'internal scratch']
  %s0 = inlined_call_operand.hbm [shape: f32[2,32,256], index: 0, kind: input, shape index: {}]
  %s1 = inlined_call_operand.vmem [shape: f32[2,32], index: 1, kind: input, shape index: {}]
  %s2 = inlined_call_operand.vmem [shape: f32[32,2], index: 2, kind: input, shape index: {}]
  %s3 = inlined_call_operand.hbm [shape: f32[2,32,256], index: 3, kind: output, shape index: {0}]
  %s4 = inlined_call_operand.hbm [shape: f32[2,32,256], index: 4, kind: output, shape index: {1}]
  %5 = xla_tuple %s3, %s4
  %s6 = sld [smem:[#allocation0]]
  $region57: #{tpu_custom_call.1} parent=0
    _
  %s8 = ssub.s32 1, %s6
  %s9 = scalar_select 0, %s8, %s6
  $region1: #{tpu_custom_call.1} parent=0
    #allocation2 [shape = 'u8[65536]{0}', space=vmem, size = 0x10000, scoped, tag = 'input window, operand 0']
    #allocation3 [shape = 's32[2]{0}', space=sflag, size = 0x8, scoped, tag = 'scoped memory for tpu_custom_call.1']
    #allocation4 [shape = 's32[2]{0}', space=sflag, size = 0x8, scoped, tag = 'scoped memory for tpu_custom_call.1']
    #allocation5 [shape = 'u8[65536]{0}', space=vmem, size = 0x10000, scoped, tag = 'output window, operand 0']
    #allocation6 [shape = 'u8[65536]{0}', space=vmem, size = 0x10000, scoped, tag = 'output window, operand 1']
    #allocation7 [shape = 's32[2]{0}', space=sflag, size = 0x8, scoped, tag = 'scoped memory for tpu_custom_call.1']
    %10 = vsyncpa [#allocation3], 0
    %s11 = scalar_lea.sflag [#allocation3], 1
    %12 = vsyncpa %s11, 0
    %13 = vsyncpa [#allocation4], 0
    %s14 = scalar_lea.sflag [#allocation4], 1
    %15 = vsyncpa %s14, 0
    %16 = vsyncpa [#allocation7], 0
    %s17 = scalar_lea.sflag [#allocation7], 1
    %18 = vsyncpa %s17, 0
    loop: start=0, step=1, limit=4
    $region2: #{tpu_custom_call.1} parent=1 // loop_pre_header
      _
    $region3: #{tpu_custom_call.1} parent=1 // loop_header
      %s20 = sphi 0, %s24
      %p21 = scmp.ge.s32.totalorder %s20, 4
      %s30 = sphi 0, %s32
      %s33 = sphi 0, %s30
      %s34 = sphi 0, %s33
      %s50 = sphi 0, %s34
      %s54 = sphi 0, %s54
      %s56 = sphi 0, %s54
      %s57 = sphi 0, %s56
      %s71 = sphi 0, %s57
      %s75 = sphi 0, %s75
      %s77 = sphi 0, %s75
      %s78 = sphi 0, %s77
      %s92 = sphi 0, %s78
      %s98 = sphi 0, %s100
      %s101 = sphi 0, %s98
      %s102 = sphi 0, %s101
      %s118 = sphi 0, %s102
      %s124 = sphi 0, %s126
      %s127 = sphi 0, %s124
      %s128 = sphi 0, %s127
      %s144 = sphi 0, %s128
    $region4: #{tpu_custom_call.1} parent=1 // loop_header_branch
      %23 = sbr.rel (%p21) target = $region8
    $region5: #{tpu_custom_call.1} parent=1 // loop_body
      %s25 = ssub.s32 %s20, 1
      %s26 = ssub.s32 %s20, 2
      %s27 = sadd.s32 %s20, 1
      %s28 = ssub.s32 %s20, %s27
      %p29 = scmp.eq.s32.totalorder %s28, 0
      %s31 = sadd.s32 %s30, 1
      %s32 = scalar_select %p29, %s30, %s31
      %p35 = pneg %p29
      %p36 = scmp.eq.s32.totalorder %s20, 1
      %p37 = por %p35, %p36
      %p38 = scmp.ne.s32.totalorder %s30, %s33
      %p39 = scmp.eq.s32.totalorder %s20, 0
      %p40 = por %p38, %p39
      %p41 = scmp.ne.s32.totalorder %s30, %s33
      %p42 = scmp.eq.s32.totalorder %s25, 1
      %p43 = por %p41, %p42
      %p44 = scmp.ne.s32.totalorder %s33, %s34
      %p45 = scmp.eq.s32.totalorder %s25, 0
      %p46 = por %p44, %p45
      %p47 = scmp.ne.s32.totalorder %s33, %s34
      %p48 = scmp.eq.s32.totalorder %s26, 1
      %p49 = por %p47, %p48
      %p51 = scmp.ne.s32.totalorder %s34, %s50
      %p52 = scmp.eq.s32.totalorder %s26, 0
      %p53 = por %p51, %p52
      %s55 = sadd.s32 %s54, 1
      %p58 = scmp.eq.s32.totalorder %s20, 1
      %p59 = scmp.ne.s32.totalorder %s54, %s56
      %p60 = scmp.eq.s32.totalorder %s20, 0
      %p61 = por %p59, %p60
      %p62 = scmp.ne.s32.totalorder %s54, %s56
      %p63 = scmp.eq.s32.totalorder %s25, 1
      %p64 = por %p62, %p63
      %p65 = scmp.ne.s32.totalorder %s56, %s57
      %p66 = scmp.eq.s32.totalorder %s25, 0
      %p67 = por %p65, %p66
      %p68 = scmp.ne.s32.totalorder %s56, %s57
      %p69 = scmp.eq.s32.totalorder %s26, 1
      %p70 = por %p68, %p69
      %p72 = scmp.ne.s32.totalorder %s57, %s71
      %p73 = scmp.eq.s32.totalorder %s26, 0
      %p74 = por %p72, %p73
      %s76 = sadd.s32 %s75, 1
      %p79 = scmp.eq.s32.totalorder %s20, 1
      %p80 = scmp.ne.s32.totalorder %s75, %s77
      %p81 = scmp.eq.s32.totalorder %s20, 0
      %p82 = por %p80, %p81
      %p83 = scmp.ne.s32.totalorder %s75, %s77
      %p84 = scmp.eq.s32.totalorder %s25, 1
      %p85 = por %p83, %p84
      %p86 = scmp.ne.s32.totalorder %s77, %s78
      %p87 = scmp.eq.s32.totalorder %s25, 0
      %p88 = por %p86, %p87
      %p89 = scmp.ne.s32.totalorder %s77, %s78
      %p90 = scmp.eq.s32.totalorder %s26, 1
      %p91 = por %p89, %p90
      %p93 = scmp.ne.s32.totalorder %s78, %s92
      %p94 = scmp.eq.s32.totalorder %s26, 0
      %p95 = por %p93, %p94
      %s96 = ssub.s32 %s20, %s27
      %p97 = scmp.eq.s32.totalorder %s96, 0
      %s99 = sadd.s32 %s98, 1
      %s100 = scalar_select %p97, %s98, %s99
      %p103 = pneg %p97
      %p104 = scmp.eq.s32.totalorder %s20, 1
      %p105 = por %p103, %p104
      %p106 = scmp.ne.s32.totalorder %s98, %s101
      %p107 = scmp.eq.s32.totalorder %s20, 0
      %p108 = por %p106, %p107
      %p109 = scmp.ne.s32.totalorder %s98, %s101
      %p110 = scmp.eq.s32.totalorder %s25, 1
      %p111 = por %p109, %p110
      %p112 = scmp.ne.s32.totalorder %s101, %s102
      %p113 = scmp.eq.s32.totalorder %s25, 0
      %p114 = por %p112, %p113
      %p115 = scmp.ne.s32.totalorder %s101, %s102
      %p116 = scmp.eq.s32.totalorder %s26, 1
      %p117 = por %p115, %p116
      %p119 = scmp.ne.s32.totalorder %s102, %s118
      %p120 = scmp.eq.s32.totalorder %s26, 0
      %p121 = por %p119, %p120
      %s122 = ssub.s32 %s20, %s27
      %p123 = scmp.eq.s32.totalorder %s122, 0
      %s125 = sadd.s32 %s124, 1
      %s126 = scalar_select %p123, %s124, %s125
      %p129 = pneg %p123
      %p130 = scmp.eq.s32.totalorder %s20, 1
      %p131 = por %p129, %p130
      %p132 = scmp.ne.s32.totalorder %s124, %s127
      %p133 = scmp.eq.s32.totalorder %s20, 0
      %p134 = por %p132, %p133
      %p135 = scmp.ne.s32.totalorder %s124, %s127
      %p136 = scmp.eq.s32.totalorder %s25, 1
      %p137 = por %p135, %p136
      %p138 = scmp.ne.s32.totalorder %s127, %s128
      %p139 = scmp.eq.s32.totalorder %s25, 0
      %p140 = por %p138, %p139
      %p141 = scmp.ne.s32.totalorder %s127, %s128
      %p142 = scmp.eq.s32.totalorder %s26, 1
      %p143 = por %p141, %p142
      %p145 = scmp.ne.s32.totalorder %s128, %s144
      %p146 = scmp.eq.s32.totalorder %s26, 0
      %p147 = por %p145, %p146
      %p148 = scmp.le.s32.totalorder 1, %s20
      %p149 = scmp.lt.s32.totalorder %s20, 3
      %p150 = pnand %p148, %p149
      %p151 = pneg %p150
      // Predicated region
      $region9: #{tpu_custom_call.1} parent=5 // pred_check
        _
      $region10: #{tpu_custom_call.1} parent=5 // pred_check_branch
        %153 = sbr.rel (%p150) target = $region12
      $region11: #{tpu_custom_call.1} parent=5 // pred_region
        %s154 = ssub.s32 %s20, 1
        // Predicated region
        $region13: #{tpu_custom_call.1} parent=11 // pred_check
          %p155 = pneg %p67
        $region14: #{tpu_custom_call.1} parent=11 // pred_check_branch
          %157 = sbr.rel (%p155) target = $region16
        $region15: #{tpu_custom_call.1} parent=11 // pred_region
          _
        $region16: #{tpu_custom_call.1} parent=11 // pred_fallthru
          _
        // Predicated region
        $region17: #{tpu_custom_call.1} parent=11 // pred_check
          %p158 = pneg %p88
        $region18: #{tpu_custom_call.1} parent=11 // pred_check_branch
          %160 = sbr.rel (%p158) target = $region20
        $region19: #{tpu_custom_call.1} parent=11 // pred_region
          _
        $region20: #{tpu_custom_call.1} parent=11 // pred_fallthru
          _
      $region12: #{tpu_custom_call.1} parent=5 // pred_fallthru
        _
      %p161 = scmp.lt.s32.totalorder %s20, 2
      // Predicated region
      $region21: #{tpu_custom_call.1} parent=5 // pred_check
        %p162 = pneg %p161
      $region22: #{tpu_custom_call.1} parent=5 // pred_check_branch
        %164 = sbr.rel (%p162) target = $region24
      $region23: #{tpu_custom_call.1} parent=5 // pred_region
        // Predicated region
        $region25: #{tpu_custom_call.1} parent=23 // pred_check
          %p165 = pneg %p40
        $region26: #{tpu_custom_call.1} parent=23 // pred_check_branch
          %167 = sbr.rel (%p165) target = $region28
        $region27: #{tpu_custom_call.1} parent=23 // pred_region
          %s168 = sand.u32 %s30, 1
          %s169 = scalar_lea.sflag [#allocation3], %s168
          %s170 = sand.u32 %s30, 1
          %s171 = smul.addr %s170, 64
          %s172 = scalar_lea.vmem [#allocation2], %s171
          %s174 = ssub.s32 1024, 1024
          %175 = vsyncadd %s169, %s174
          %s176 = smul.addr %s20, 8
          %s177 = smul.addr %s176, 128
          %s178 = scalar_lea.hbm %s0, %s177
          %s179 = sshll.u32 %s172, 4
          %s180 = int_to_ptr.vmem [resolvable:$true] %s179
          %185 = dma.hbm_to_vmem [thread:$0]  %s178, 1024, %s180, %s169, 256, 256, 16
        $region28: #{tpu_custom_call.1} parent=23 // pred_fallthru
          _
      $region24: #{tpu_custom_call.1} parent=5 // pred_fallthru
        _
      %p186 = scmp.le.s32.totalorder 1, %s20
      %p187 = scmp.lt.s32.totalorder %s20, 3
      %p188 = pnand %p186, %p187
      %p189 = pneg %p188
      // Predicated region
      $region29: #{tpu_custom_call.1} parent=5 // pred_check
        _
      $region30: #{tpu_custom_call.1} parent=5 // pred_check_branch
        %191 = sbr.rel (%p188) target = $region32
      $region31: #{tpu_custom_call.1} parent=5 // pred_region
        %s192 = ssub.s32 %s20, 1
        %s193 = sand.u32 %s33, 1
        %s194 = scalar_lea.sflag [#allocation3], %s193
        %s195 = sand.u32 %s33, 1
        %s196 = smul.addr %s195, 64
        %s197 = scalar_lea.vmem [#allocation2], %s196
        // Predicated region
        $region33: #{tpu_custom_call.1} parent=31 // pred_check
          %p198 = pneg %p46
        $region34: #{tpu_custom_call.1} parent=31 // pred_check_branch
          %200 = sbr.rel (%p198) target = $region36
        $region35: #{tpu_custom_call.1} parent=31 // pred_region
          %201 = dma.done %s194, 1024
        $region36: #{tpu_custom_call.1} parent=31 // pred_fallthru
          _
        %s202 = sand.u32 %s33, 1
        %s203 = scalar_lea.sflag [#allocation3], %s202
        %s204 = sand.u32 %s33, 1
        %s205 = smul.addr %s204, 64
        %s206 = scalar_lea.vmem [#allocation2], %s205
        %p207 = pneg %p46
        %p208 = pneg %p43
        %p209 = pneg %p67
        %p210 = pneg %p64
        %p211 = pneg %p88
        %p212 = pneg %p85
        %p213 = pneg %p114
        %p214 = pneg %p111
        %s215 = sand.u32 %s101, 1
        %s216 = scalar_lea.sflag [#allocation4], %s215
        %s217 = sand.u32 %s101, 1
        %s218 = smul.addr %s217, 64
        %s219 = scalar_lea.vmem [#allocation5], %s218
        %p220 = pneg %p140
        %p221 = pneg %p137
        %s222 = sand.u32 %s127, 1
        %s223 = scalar_lea.sflag [#allocation7], %s222
        %s224 = sand.u32 %s127, 1
        %s225 = smul.addr %s224, 64
        %s226 = scalar_lea.vmem [#allocation6], %s225
        %v227 = vld [vmem:[%s197] sm:$0xff]
        %v228 = vld [vmem:[%s197 + $0x8] sm:$0xff]
        %v229 = vld [vmem:[%s197 + $0x10] sm:$0xff]
        %v230 = vld [vmem:[%s197 + $0x18] sm:$0xff]
        %v231 = vld [vmem:[%s197 + $0x20] sm:$0xff]
        %v232 = vld [vmem:[%s197 + $0x28] sm:$0xff]
        %v233 = vld [vmem:[%s197 + $0x30] sm:$0xff]
        %v234 = vld [vmem:[%s197 + $0x38] sm:$0xff]
        %v235 = vadd.f32 %v227, %v228
        %236 = vadd.xlane.f32.xlu0 %v235
        %v237 = vpop.xlane.xlu0 %236
        %v238 = vadd.f32 %v229, %v230
        %239 = vadd.xlane.f32.xlu0 %v238
        %v240 = vpop.xlane.xlu0 %239
        %v241 = vadd.f32 %v231, %v232
        %242 = vadd.xlane.f32.xlu0 %v241
        %v243 = vpop.xlane.xlu0 %242
        %v244 = vadd.f32 %v233, %v234
        %245 = vadd.xlane.f32.xlu0 %v244
        %v246 = vpop.xlane.xlu0 %245
        %v247 = vmul.f32 %v227, %v227
        %v248 = vmul.f32 %v228, %v228
        %v249 = vmul.f32 %v229, %v229
        %v250 = vmul.f32 %v230, %v230
        %v251 = vmul.f32 %v231, %v231
        %v252 = vmul.f32 %v232, %v232
        %v253 = vmul.f32 %v233, %v233
        %v254 = vmul.f32 %v234, %v234
        %v255 = vadd.f32 %v247, %v248
        %256 = vadd.xlane.f32.xlu0 %v255
        %v257 = vpop.xlane.xlu0 %256
        %v258 = vadd.f32 %v249, %v250
        %259 = vadd.xlane.f32.xlu0 %v258
        %v260 = vpop.xlane.xlu0 %259
        %v261 = vadd.f32 %v251, %v252
        %262 = vadd.xlane.f32.xlu0 %v261
        %v263 = vpop.xlane.xlu0 %262
        %v264 = vadd.f32 %v253, %v254
        %265 = vadd.xlane.f32.xlu0 %v264
        %v266 = vpop.xlane.xlu0 %265
        %v267 = vmul.f32 %v237, 0.00390625
        %v268 = vmul.f32 %v240, 0.00390625
        %v269 = vmul.f32 %v243, 0.00390625
        %v270 = vmul.f32 %v246, 0.00390625
        %v271 = vmul.f32 %v257, 0.00390625
        %v272 = vmul.f32 %v260, 0.00390625
        %v273 = vmul.f32 %v263, 0.00390625
        %v274 = vmul.f32 %v266, 0.00390625
        %v275 = vmul.f32 %v267, %v267
        %v276 = vmul.f32 %v268, %v268
        %v277 = vmul.f32 %v269, %v269
        %v278 = vmul.f32 %v270, %v270
        %v279 = vsub.f32 %v271, %v275
        %v280 = vsub.f32 %v272, %v276
        %v281 = vsub.f32 %v273, %v277
        %v282 = vsub.f32 %v274, %v278
        %v283 = vmax.f32 %v279, 0.0
        %v284 = vmax.f32 %v280, 0.0
        %v285 = vmax.f32 %v281, 0.0
        %v286 = vmax.f32 %v282, 0.0
        %v287 = vsub.f32 %v227, %v267
        %v288 = vsub.f32 %v228, %v267
        %v289 = vsub.f32 %v229, %v268
        %v290 = vsub.f32 %v230, %v268
        %v291 = vsub.f32 %v231, %v269
        %v292 = vsub.f32 %v232, %v269
        %v293 = vsub.f32 %v233, %v270
        %v294 = vsub.f32 %v234, %v270
        %v295 = vadd.f32 %v283, 1e-05
        %v296 = vadd.f32 %v284, 1e-05
        %v297 = vadd.f32 %v285, 1e-05
        %v298 = vadd.f32 %v286, 1e-05
        %v299 = vrsqrt.pop %v295
        %v300 = vrsqrt.pop %v296
        %v301 = vrsqrt.pop %v297
        %v302 = vrsqrt.pop %v298
        %v303 = vmul.f32 %v287, %v299
        %v304 = vmul.f32 %v288, %v299
        %v305 = vmul.f32 %v289, %v300
        %v306 = vmul.f32 %v290, %v300
        %v307 = vmul.f32 %v291, %v301
        %v308 = vmul.f32 %v292, %v301
        %v309 = vmul.f32 %v293, %v302
        %v310 = vmul.f32 %v294, %v302
        %311 = vst [vmem:[%s226] sm:$0xff] %v303
        %312 = vst [vmem:[%s226 + $0x8] sm:$0xff] %v304
        %313 = vst [vmem:[%s226 + $0x10] sm:$0xff] %v305
        %314 = vst [vmem:[%s226 + $0x18] sm:$0xff] %v306
        %315 = vst [vmem:[%s226 + $0x20] sm:$0xff] %v307
        %316 = vst [vmem:[%s226 + $0x28] sm:$0xff] %v308
        %317 = vst [vmem:[%s226 + $0x30] sm:$0xff] %v309
        %318 = vst [vmem:[%s226 + $0x38] sm:$0xff] %v310
        %v319 = vsub.f32 %v227, %v303
        %v320 = vsub.f32 %v228, %v304
        %v321 = vsub.f32 %v229, %v305
        %v322 = vsub.f32 %v230, %v306
        %v323 = vsub.f32 %v231, %v307
        %v324 = vsub.f32 %v232, %v308
        %v325 = vsub.f32 %v233, %v309
        %v326 = vsub.f32 %v234, %v310
        %v327 = vmax.f32 %v319, 1e-06
        %v328 = vmax.f32 %v320, 1e-06
        %v329 = vmax.f32 %v321, 1e-06
        %v330 = vmax.f32 %v322, 1e-06
        %v331 = vmax.f32 %v323, 1e-06
        %v332 = vmax.f32 %v324, 1e-06
        %v333 = vmax.f32 %v325, 1e-06
        %v334 = vmax.f32 %v326, 1e-06
        %v335 = vmul.f32 %v327, %v327
        %v336 = vmul.f32 %v328, %v328
        %v337 = vmul.f32 %v329, %v329
        %v338 = vmul.f32 %v330, %v330
        %v339 = vmul.f32 %v331, %v331
        %v340 = vmul.f32 %v332, %v332
        %v341 = vmul.f32 %v333, %v333
        %v342 = vmul.f32 %v334, %v334
        %v343 = vmul.f32 %v335, %v327
        %v344 = vmul.f32 %v336, %v328
        %v345 = vmul.f32 %v337, %v329
        %v346 = vmul.f32 %v338, %v330
        %v347 = vmul.f32 %v339, %v331
        %v348 = vmul.f32 %v340, %v332
        %v349 = vmul.f32 %v341, %v333
        %v350 = vmul.f32 %v342, %v334
        %v351 = vadd.f32 %v343, %v344
        %352 = vadd.xlane.f32.xlu0 %v351
        %v353 = vpop.xlane.xlu0 %352
        %v354 = vadd.f32 %v345, %v346
        %355 = vadd.xlane.f32.xlu0 %v354
        %v356 = vpop.xlane.xlu0 %355
        %v357 = vadd.f32 %v347, %v348
        %358 = vadd.xlane.f32.xlu0 %v357
        %v359 = vpop.xlane.xlu0 %358
        %v360 = vadd.f32 %v349, %v350
        %361 = vadd.xlane.f32.xlu0 %v360
        %v362 = vpop.xlane.xlu0 %361
        %v363 = vmul.f32 %v353, 0.00390625
        %v364 = vmul.f32 %v356, 0.00390625
        %v365 = vmul.f32 %v359, 0.00390625
        %v366 = vmul.f32 %v362, 0.00390625
        %v367 = vpow.f32 %v363, 0.33333334
        %v368 = vpow.f32 %v364, 0.33333334
        %v369 = vpow.f32 %v365, 0.33333334
        %v370 = vpow.f32 %v366, 0.33333334
        %v371 = vld [vmem:[%s1] sm:$0x3]
        %v372 = vld [vmem:[%s2] sm:$0xff]
        %v373 = vld [vmem:[%s2 + $0x8] sm:$0xff]
        %v374 = vld [vmem:[%s2 + $0x10] sm:$0xff]
        %v375 = vld [vmem:[%s2 + $0x18] sm:$0xff]
        %vm376 = vcmask 261120
        %v378 = vsel %vm376, %v371, 0
        %380 = vmatprep.subr.mxu0 0.0
        %381 = vmatpush1.msra.mxu0 %v367
        %382 = vmatprep.subr.mxu0 0.0
        %383 = vmatpush1.msra.mxu0 %v368
        %384 = vmatprep.subr.mxu0 0.0
        %385 = vmatpush1.msra.mxu0 %v369
        %386 = vmatprep.subr.mxu0 0.0
        %387 = vmatpush1.msra.mxu0 %v370
        %388 = vmatprep.subr.mxu0 0.0
        %389 = vmatpush1.msra.mxu0 0.0
        %390 = vmatprep.subr.mxu0 0.0
        %391 = vmatpush1.msra.mxu0 0.0
        %392 = vmatprep.subr.mxu0 0.0
        %393 = vmatpush1.msra.mxu0 0.0
        %394 = vmatprep.subr.mxu0 0.0
        %395 = vmatpush1.msra.mxu0 0.0
        %396 = vmatprep.subr.mxu0 0.0
        %397 = vmatpush1.msra.mxu0 0.0
        %398 = vmatprep.subr.mxu0 0.0
        %399 = vmatpush1.msra.mxu0 0.0
        %400 = vmatprep.subr.mxu0 0.0
        %401 = vmatpush1.msra.mxu0 0.0
        %402 = vmatprep.subr.mxu0 0.0
        %403 = vmatpush1.msra.mxu0 0.0
        %404 = vmatprep.subr.mxu0 0.0
        %405 = vmatpush1.msra.mxu0 0.0
        %406 = vmatprep.subr.mxu0 0.0
        %407 = vmatpush1.msra.mxu0 0.0
        %408 = vmatprep.subr.mxu0 0.0
        %409 = vmatpush1.msra.mxu0 0.0
        %410 = vmatprep.subr.mxu0 0.0
        %411 = vmatpush1.msra.mxu0 0.0
        %412 = vmatprep.subr.mxu0 0.0
        %413 = vmatpush1.msra.mxu0 0.0
        %414 = vmatprep.subr.mxu0 0.0
        %415 = vmatpush1.msra.mxu0 0.0
        %416 = vmatprep.subr.mxu0 0.0
        %417 = vmatpush1.msra.mxu0 0.0
        %418 = vmatprep.subr.mxu0 0.0
        %419 = vmatpush1.msra.mxu0 0.0
        %420 = vmatprep.subr.mxu0 0.0
        %421 = vmatpush1.msra.mxu0 0.0
        %422 = vmatprep.subr.mxu0 0.0
        %423 = vmatpush1.msra.mxu0 0.0
        %424 = vmatprep.subr.mxu0 0.0
        %425 = vmatpush1.msra.mxu0 0.0
        %426 = vmatprep.subr.mxu0 0.0
        %427 = vmatpush1.msra.mxu0 0.0
        %428 = vmatprep.subr.mxu0 0.0
        %429 = vmatpush1.msra.mxu0 0.0
        %430 = vmatprep.subr.mxu0 0.0
        %431 = vmatpush1.msra.mxu0 0.0
        %432 = vmatprep.subr.mxu0 0.0
        %433 = vmatpush1.msra.mxu0 0.0
        %434 = vmatprep.subr.mxu0 0.0
        %435 = vmatpush1.msra.mxu0 0.0
        %436 = vmatprep.subr.mxu0 0.0
        %437 = vmatpush1.msra.mxu0 0.0
        %438 = vmatprep.subr.mxu0 0.0
        %439 = vmatpush1.msra.mxu0 0.0
        %440 = vmatprep.subr.mxu0 0.0
        %441 = vmatpush1.msra.mxu0 0.0
        %442 = vmatprep.subr.mxu0 0.0
        %443 = vmatpush1.msra.mxu0 0.0
        %444 = vmatprep.mubr.f32.mxu0 0.0
        %445 = vmatmul.mubr.f32.gmra.mrb[0].mxu0 %v378
        %v446 = vpop.f32.mrb[0].mxu0
        %v447 = vadd.f32 0.0, %v446
        %v448 = vpop.f32.mrb[0].mxu0
        %449 = vdwg.mxu0
        %v450 = vmax.f32 %v447, 0.0
        %vm451 = vcmask 15360
        %v453 = vsel %vm451, %v372, 0
        %v456 = vsel %vm451, %v373, 0
        %v459 = vsel %vm451, %v374, 0
        %v462 = vsel %vm451, %v375, 0
        %vm464 = vcmask 1041408
        %v466 = vsel %vm464, %v450, 0
        %468 = vmatprep.subr.mxu0 0.0
        %469 = vmatpush1.msra.mxu0 %v466
        %470 = vmatprep.subr.mxu0 0.0
        %471 = vmatpush1.msra.mxu0 0.0
        %472 = vmatprep.subr.mxu0 0.0
        %473 = vmatpush1.msra.mxu0 0.0
        %474 = vmatprep.subr.mxu0 0.0
        %475 = vmatpush1.msra.mxu0 0.0
        %476 = vmatprep.subr.mxu0 0.0
        %477 = vmatpush1.msra.mxu0 0.0
        %478 = vmatprep.subr.mxu0 0.0
        %479 = vmatpush1.msra.mxu0 0.0
        %480 = vmatprep.subr.mxu0 0.0
        %481 = vmatpush1.msra.mxu0 0.0
        %482 = vmatprep.subr.mxu0 0.0
        %483 = vmatpush1.msra.mxu0 0.0
        %484 = vmatprep.subr.mxu0 0.0
        %485 = vmatpush1.msra.mxu0 0.0
        %486 = vmatprep.subr.mxu0 0.0
        %487 = vmatpush1.msra.mxu0 0.0
        %488 = vmatprep.subr.mxu0 0.0
        %489 = vmatpush1.msra.mxu0 0.0
        %490 = vmatprep.subr.mxu0 0.0
        %491 = vmatpush1.msra.mxu0 0.0
        %492 = vmatprep.subr.mxu0 0.0
        %493 = vmatpush1.msra.mxu0 0.0
        %494 = vmatprep.subr.mxu0 0.0
        %495 = vmatpush1.msra.mxu0 0.0
        %496 = vmatprep.subr.mxu0 0.0
        %497 = vmatpush1.msra.mxu0 0.0
        %498 = vmatprep.subr.mxu0 0.0
        %499 = vmatpush1.msra.mxu0 0.0
        %500 = vmatprep.subr.mxu0 0.0
        %501 = vmatpush1.msra.mxu0 0.0
        %502 = vmatprep.subr.mxu0 0.0
        %503 = vmatpush1.msra.mxu0 0.0
        %504 = vmatprep.subr.mxu0 0.0
        %505 = vmatpush1.msra.mxu0 0.0
        %506 = vmatprep.subr.mxu0 0.0
        %507 = vmatpush1.msra.mxu0 0.0
        %508 = vmatprep.subr.mxu0 0.0
        %509 = vmatpush1.msra.mxu0 0.0
        %510 = vmatprep.subr.mxu0 0.0
        %511 = vmatpush1.msra.mxu0 0.0
        %512 = vmatprep.subr.mxu0 0.0
        %513 = vmatpush1.msra.mxu0 0.0
        %514 = vmatprep.subr.mxu0 0.0
        %515 = vmatpush1.msra.mxu0 0.0
        %516 = vmatprep.subr.mxu0 0.0
        %517 = vmatpush1.msra.mxu0 0.0
        %518 = vmatprep.subr.mxu0 0.0
        %519 = vmatpush1.msra.mxu0 0.0
        %520 = vmatprep.subr.mxu0 0.0
        %521 = vmatpush1.msra.mxu0 0.0
        %522 = vmatprep.subr.mxu0 0.0
        %523 = vmatpush1.msra.mxu0 0.0
        %524 = vmatprep.subr.mxu0 0.0
        %525 = vmatpush1.msra.mxu0 0.0
        %526 = vmatprep.subr.mxu0 0.0
        %527 = vmatpush1.msra.mxu0 0.0
        %528 = vmatprep.subr.mxu0 0.0
        %529 = vmatpush1.msra.mxu0 0.0
        %530 = vmatprep.subr.mxu0 0.0
        %531 = vmatpush1.msra.mxu0 0.0
        %532 = vmatprep.mubr.f32.mxu0 0.0
        %533 = vmatmul.mubr.f32.gmra.mrb[0].mxu0 %v453
        %v534 = vpop.f32.mrb[0].mxu0
        %v535 = vadd.f32 0.0, %v534
        %v536 = vpop.f32.mrb[0].mxu0
        %537 = vmatprep.mubr.f32.mxu0 0.0
        %538 = vmatmul.mubr.f32.gmra.mrb[0].mxu0 %v456
        %v539 = vpop.f32.mrb[0].mxu0
        %v540 = vadd.f32 0.0, %v539
        %v541 = vpop.f32.mrb[0].mxu0
        %542 = vmatprep.mubr.f32.mxu0 0.0
        %543 = vmatmul.mubr.f32.gmra.mrb[0].mxu0 %v459
        %v544 = vpop.f32.mrb[0].mxu0
        %v545 = vadd.f32 0.0, %v544
        %v546 = vpop.f32.mrb[0].mxu0
        %547 = vmatprep.mubr.f32.mxu0 0.0
        %548 = vmatmul.mubr.f32.gmra.mrb[0].mxu0 %v462
        %v549 = vpop.f32.mrb[0].mxu0
        %v550 = vadd.f32 0.0, %v549
        %v551 = vpop.f32.mrb[0].mxu0
        %552 = vdwg.mxu0
        %v553 = vxor.u32 %v535, 2147483648
        %v554 = vxor.u32 %v540, 2147483648
        %v555 = vxor.u32 %v545, 2147483648
        %v556 = vxor.u32 %v550, 2147483648
        %v557 = vmul.f32 %v553, 1.442695
        %v558 = vpow.pop %v557
        %v559 = vmul.f32 %v554, 1.442695
        %v560 = vpow.pop %v559
        %v561 = vmul.f32 %v555, 1.442695
        %v562 = vpow.pop %v561
        %v563 = vmul.f32 %v556, 1.442695
        %v564 = vpow.pop %v563
        %v565 = vadd.f32 %v558, 1.0
        %v566 = vadd.f32 %v560, 1.0
        %v567 = vadd.f32 %v562, 1.0
        %v568 = vadd.f32 %v564, 1.0
        %v569 = vrcp.pop %v565
        %v570 = vmul.f32 1.0, %v569
        %v571 = vrcp.pop %v566
        %v572 = vmul.f32 1.0, %v571
        %v573 = vrcp.pop %v567
        %v574 = vmul.f32 1.0, %v573
        %v575 = vrcp.pop %v568
        %v576 = vmul.f32 1.0, %v575
        %v577 = vld [vmem:[%s197] sm:$0xff]
        %v578 = vld [vmem:[%s197 + $0x8] sm:$0xff]
        %v579 = vld [vmem:[%s197 + $0x10] sm:$0xff]
        %v580 = vld [vmem:[%s197 + $0x18] sm:$0xff]
        %v581 = vld [vmem:[%s197 + $0x20] sm:$0xff]
        %v582 = vld [vmem:[%s197 + $0x28] sm:$0xff]
        %v583 = vld [vmem:[%s197 + $0x30] sm:$0xff]
        %v584 = vld [vmem:[%s197 + $0x38] sm:$0xff]
        %v585 = vld [vmem:[%s226] sm:$0xff]
        %v586 = vld [vmem:[%s226 + $0x8] sm:$0xff]
        %v587 = vld [vmem:[%s226 + $0x10] sm:$0xff]
        %v588 = vld [vmem:[%s226 + $0x18] sm:$0xff]
        %v589 = vld [vmem:[%s226 + $0x20] sm:$0xff]
        %v590 = vld [vmem:[%s226 + $0x28] sm:$0xff]
        %v591 = vld [vmem:[%s226 + $0x30] sm:$0xff]
        %v592 = vld [vmem:[%s226 + $0x38] sm:$0xff]
        %v593 = vsub.f32 %v577, %v585
        %v594 = vsub.f32 %v578, %v586
        %v595 = vsub.f32 %v579, %v587
        %v596 = vsub.f32 %v580, %v588
        %v597 = vsub.f32 %v581, %v589
        %v598 = vsub.f32 %v582, %v590
        %v599 = vsub.f32 %v583, %v591
        %v600 = vsub.f32 %v584, %v592
        %602 = vset.pattern.permute.xlu0 0
        %603 = vperm.xlu0 %602, %v570
        %v604 = vpop.permute.xlu0 %603
        %607 = vset.pattern.permute.xlu0 0
        %608 = vperm.xlu0 %607, %v572
        %v609 = vpop.permute.xlu0 %608
        %612 = vset.pattern.permute.xlu0 0
        %613 = vperm.xlu0 %612, %v574
        %v614 = vpop.permute.xlu0 %613
        %617 = vset.pattern.permute.xlu0 0
        %618 = vperm.xlu0 %617, %v576
        %v619 = vpop.permute.xlu0 %618
        %v621 = vmul.f32 %v593, %v604
        %v622 = vmul.f32 %v594, %v604
        %v623 = vmul.f32 %v595, %v609
        %v624 = vmul.f32 %v596, %v609
        %v625 = vmul.f32 %v597, %v614
        %v626 = vmul.f32 %v598, %v614
        %v627 = vmul.f32 %v599, %v619
        %v628 = vmul.f32 %v600, %v619
        %v629 = vadd.f32 %v621, %v585
        %v630 = vadd.f32 %v622, %v586
        %v631 = vadd.f32 %v623, %v587
        %v632 = vadd.f32 %v624, %v588
        %v633 = vadd.f32 %v625, %v589
        %v634 = vadd.f32 %v626, %v590
        %v635 = vadd.f32 %v627, %v591
        %v636 = vadd.f32 %v628, %v592
        %637 = vst [vmem:[%s219] sm:$0xff] %v629
        %638 = vst [vmem:[%s219 + $0x8] sm:$0xff] %v630
        %639 = vst [vmem:[%s219 + $0x10] sm:$0xff] %v631
        %640 = vst [vmem:[%s219 + $0x18] sm:$0xff] %v632
        %641 = vst [vmem:[%s219 + $0x20] sm:$0xff] %v633
        %642 = vst [vmem:[%s219 + $0x28] sm:$0xff] %v634
        %643 = vst [vmem:[%s219 + $0x30] sm:$0xff] %v635
        %644 = vst [vmem:[%s219 + $0x38] sm:$0xff] %v636
        %s645 = sand.u32 %s101, 1
        %s646 = scalar_lea.sflag [#allocation4], %s645
        %s647 = sand.u32 %s101, 1
        %s648 = smul.addr %s647, 64
        %s649 = scalar_lea.vmem [#allocation5], %s648
        %s650 = sand.u32 %s127, 1
        %s651 = scalar_lea.sflag [#allocation7], %s650
        %s652 = sand.u32 %s127, 1
        %s653 = smul.addr %s652, 64
        %s654 = scalar_lea.vmem [#allocation6], %s653
        // Predicated region
        $region37: #{tpu_custom_call.1} parent=31 // pred_check
          %p655 = pneg %p111
        $region38: #{tpu_custom_call.1} parent=31 // pred_check_branch
          %657 = sbr.rel (%p655) target = $region40
        $region39: #{tpu_custom_call.1} parent=31 // pred_region
          %s659 = ssub.s32 1024, 1024
          %660 = vsyncadd %s646, %s659
          %s661 = smul.addr %s25, 8
          %s662 = smul.addr %s661, 128
          %s663 = scalar_lea.hbm %s3, %s662
          %s664 = sshll.u32 %s649, 4
          %s665 = int_to_ptr.vmem [resolvable:$true] %s664
          %670 = dma.vmem_to_hbm [thread:$0]  %s665, 1024, %s663, %s646, 256, 256, 16
        $region40: #{tpu_custom_call.1} parent=31 // pred_fallthru
          _
        // Predicated region
        $region41: #{tpu_custom_call.1} parent=31 // pred_check
          %p671 = pneg %p137
        $region42: #{tpu_custom_call.1} parent=31 // pred_check_branch
          %673 = sbr.rel (%p671) target = $region44
        $region43: #{tpu_custom_call.1} parent=31 // pred_region
          %s675 = ssub.s32 1024, 1024
          %676 = vsyncadd %s651, %s675
          %s677 = smul.addr %s25, 8
          %s678 = smul.addr %s677, 128
          %s679 = scalar_lea.hbm %s4, %s678
          %s680 = sshll.u32 %s654, 4
          %s681 = int_to_ptr.vmem [resolvable:$true] %s680
          %686 = dma.vmem_to_hbm [thread:$0]  %s681, 1024, %s679, %s651, 256, 256, 16
        $region44: #{tpu_custom_call.1} parent=31 // pred_fallthru
          _
      $region32: #{tpu_custom_call.1} parent=5 // pred_fallthru
        _
      %p687 = scmp.le.s32.totalorder 2, %s20
      // Predicated region
      $region45: #{tpu_custom_call.1} parent=5 // pred_check
        %p688 = pneg %p687
      $region46: #{tpu_custom_call.1} parent=5 // pred_check_branch
        %690 = sbr.rel (%p688) target = $region48
      $region47: #{tpu_custom_call.1} parent=5 // pred_region
        %s691 = ssub.s32 %s20, 2
        // Predicated region
        $region49: #{tpu_custom_call.1} parent=47 // pred_check
          %p692 = pneg %p117
        $region50: #{tpu_custom_call.1} parent=47 // pred_check_branch
          %694 = sbr.rel (%p692) target = $region52
        $region51: #{tpu_custom_call.1} parent=47 // pred_region
          %s695 = sand.u32 %s102, 1
          %s696 = scalar_lea.sflag [#allocation4], %s695
          %s697 = sand.u32 %s102, 1
          %s698 = smul.addr %s697, 64
          %s699 = scalar_lea.vmem [#allocation5], %s698
          %700 = dma.done %s696, 1024
        $region52: #{tpu_custom_call.1} parent=47 // pred_fallthru
          _
        // Predicated region
        $region53: #{tpu_custom_call.1} parent=47 // pred_check
          %p701 = pneg %p143
        $region54: #{tpu_custom_call.1} parent=47 // pred_check_branch
          %703 = sbr.rel (%p701) target = $region56
        $region55: #{tpu_custom_call.1} parent=47 // pred_region
          %s704 = sand.u32 %s128, 1
          %s705 = scalar_lea.sflag [#allocation7], %s704
          %s706 = sand.u32 %s128, 1
          %s707 = smul.addr %s706, 64
          %s708 = scalar_lea.vmem [#allocation6], %s707
          %709 = dma.done %s705, 1024
        $region56: #{tpu_custom_call.1} parent=47 // pred_fallthru
          _
      $region48: #{tpu_custom_call.1} parent=5 // pred_fallthru
        _
    $region6: #{tpu_custom_call.1} parent=1 // loop_footer
      %s24 = sadd.s32 1, %s20
    $region7: #{tpu_custom_call.1} parent=1 // loop_footer_branch
      %19 = sbr.rel target = $region3
    $region8: #{tpu_custom_call.1} parent=1 // loop_exit
      _
    %710 = vsyncpa [#allocation3], 1
    %s711 = scalar_lea.sflag [#allocation3], 1
    %712 = vsyncpa %s711, 1
    %713 = vsyncpa [#allocation4], 1
    %s714 = scalar_lea.sflag [#allocation4], 1
    %715 = vsyncpa %s714, 1
    %716 = vsyncpa [#allocation7], 1
    %s717 = scalar_lea.sflag [#allocation7], 1
    %718 = vsyncpa %s717, 1

</llo_original>
